<compile_context>
chip_gen: v6e
topology: v6e:2x2x1
jax: 0.10.0
libtpu: 0.0.40
codegen_flags: <defaults>
</compile_context>

<pallas_src>
import math

import jax
import jax.numpy as jnp
from jax import lax
from jax.experimental import pallas as pl
from jax.experimental.pallas import tpu as pltpu


LEAKY_SLOPE = 0.01      # nn.LeakyReLU default negative_slope
COS_EPS = 1e-8          # F.cosine_similarity default eps
OUT_LANES = 128         # lane-dense output slab width


def _leaky_relu(x):
    # slope < 1  =>  max(x, slope*x) == leaky_relu(x); single VALU op.
    return jnp.maximum(x, LEAKY_SLOPE * x)


def _round_up(x, m):
    return (x + m - 1) // m * m


def _cdiv(a, b):
    return -(-a // b)


def _vmem_capacity_bytes():
    try:
        return int(pltpu.get_tpu_info().vmem_capacity_bytes)
    except Exception:
        return 64 * 2**20       # conservative default (v7x per-TC VMEM)


def _choose_block(B, block_b):
    """bf16 sublane packing is 16 rows.  For multi-step grids keep the block a
    multiple of 128 (full MXU M passes) unless that pads an excessive number of
    rows, in which case fall back to 16-row granularity (cdiv-based)."""
    if B <= block_b:
        return _round_up(B, 16)
    n_steps = _cdiv(B, block_b)
    per_step = _cdiv(B, n_steps)
    blk = _round_up(per_step, 128)
    if blk * n_steps - B > max(B // 8, 128):
        blk = _round_up(per_step, 16)
    return blk


def split_similarity_kernel(
    a_ref, t_ref, c_ref,
    w1a_a_ref, w1t_t_ref, w1c_ref,            # first-layer weights: a-half, t-half, fused c-half
    b1a_ref, b1t_ref,                         # first-layer biases
    w2a_ref, b2a_ref, w2t_ref, b2t_ref,       # second-layer weights/biases
    out_ref,
):
    a = a_ref[...]          # bf16 [blk, D]
    t = t_ref[...]
    c = c_ref[...]

    H = b1a_ref.shape[-1]   # 2*D

    # Shared-c matmul computed once per step: c @ [w1_ac_c | w1_tc_c] -> [blk, 4D] f32
    hc = jnp.dot(c, w1c_ref[...], preferred_element_type=jnp.float32)

    # ---- ac_embedder: Linear(2D->2D) -> LeakyReLU -> Linear(2D->D) ----
    # cat(a, c) @ W1 == a @ W1[:D] + c @ W1[D:]   (no lane-axis concat / relayout)
    h_ac = (jnp.dot(a, w1a_a_ref[...], preferred_element_type=jnp.float32)
            + hc[:, :H] + b1a_ref[...])
    h_ac = _leaky_relu(h_ac).astype(jnp.bfloat16)
    ac = jnp.dot(h_ac, w2a_ref[...], preferred_element_type=jnp.float32) + b2a_ref[...]

    # ---- tc_embedder ----
    h_tc = (jnp.dot(t, w1t_t_ref[...], preferred_element_type=jnp.float32)
            + hc[:, H:] + b1t_ref[...])
    h_tc = _leaky_relu(h_tc).astype(jnp.bfloat16)
    tc = jnp.dot(h_tc, w2t_ref[...], preferred_element_type=jnp.float32) + b2t_ref[...]

    # ---- cosine similarity + (x + 1) * 0.5 (f32 epilogue) ----
    # torch semantics: x1.x2 / sqrt(clamp_min(|x1|^2 * |x2|^2, eps^2)); one EUP rsqrt.
    num = jnp.sum(ac * tc, axis=-1, keepdims=True)            # [blk, 1]
    ss_ac = jnp.sum(ac * ac, axis=-1, keepdims=True)
    ss_tc = jnp.sum(tc * tc, axis=-1, keepdims=True)
    inv = lax.rsqrt(jnp.maximum(ss_ac * ss_tc, COS_EPS * COS_EPS))
    logit = (num * inv + 1.0) * 0.5                           # [blk, 1]

    # lane-dense store: broadcast per-row scalar across the 128-lane slab.
    out_ref[...] = jnp.broadcast_to(logit, out_ref.shape)


def split_similarity_forward(pooled_a, pooled_t, pooled_c, params, *, block_b=256):
    """Eval-mode forward. Inputs: [B, D] each. Returns logits of shape [B] (f32)."""
    B, D = pooled_a.shape
    H = 2 * D

    blk = _choose_block(B, block_b)
    n_steps = _cdiv(B, blk)
    Bp = blk * n_steps

    def _prep(x):
        x = x.astype(jnp.bfloat16)
        if Bp != B:
            x = jnp.pad(x, ((0, Bp - B), (0, 0)))
        return x

    a, t, c = _prep(pooled_a), _prep(pooled_t), _prep(pooled_c)

    weights = (
        params["w1_ac_a"], params["w1_tc_t"], params["w1_c"],
        params["b1_ac"], params["b1_tc"],
        params["w2_ac"], params["b2_ac"],
        params["w2_tc"], params["b2_tc"],
    )

    grid = (n_steps,)
    in_block = pl.BlockSpec((blk, D), lambda i: (i, 0))

    def _const_spec(arr):
        # Full-array block, constant index map -> DMA'd once, VMEM-resident.
        # Buffered(1): no point double-buffering a block that never changes;
        # halves resident weight VMEM (matters on v7x's 64 MiB/TC at D=1024).
        return pl.BlockSpec(arr.shape, lambda i: (0, 0),
                            pipeline_mode=pl.Buffered(1))

    in_specs = [in_block, in_block, in_block] + [_const_spec(w) for w in weights]
    out_spec = pl.BlockSpec((blk, OUT_LANES), lambda i: (i, 0))

    bytes_weights = int(sum(int(w.size) * w.dtype.itemsize for w in weights))
    bytes_inputs = int(3 * B * D * 2)
    bytes_out = int(B * OUT_LANES * 4)

    # Split the grid across cores only when there are >= 2 steps AND pipelined
    # input traffic dominates the weight DMA (which v7x duplicates per-core).
    use_parallel = (n_steps >= 2) and (bytes_inputs > bytes_weights)
    dim_sem = ("parallel",) if use_parallel else ("arbitrary",)

    # Advisory cost estimate (matmul flops dominate; one rsqrt per row).
    cost = pl.CostEstimate(flops=int(24 * B * D * D),
                           transcendentals=int(B),
                           bytes_accessed=bytes_weights + bytes_inputs + bytes_out)

    # VMEM budget: single-buffered weights (Buffered(1)) + double-buffered
    # input/output blocks + f32 intermediates (hc, h_ac/h_tc, ac/tc) + headroom,
    # capped at 80% of this generation's per-core VMEM capacity.
    act_bytes = 2 * (3 * blk * D * 2) + 2 * (blk * OUT_LANES * 4)
    interm_bytes = blk * 10 * D * 4
    vmem_need = bytes_weights + act_bytes + interm_bytes + 4 * 2**20
    vmem_limit = int(min(int(0.8 * _vmem_capacity_bytes()),
                         max(vmem_need, 16 * 2**20)))

    # TODO(synk): at production D the ~24 MB bf16 weight DMA is the exposed
    # roofline for small B; hide it behind the DeBERTa backbone via a
    # cross-pallas_call prefetch (side kernel returning (sem, VMEM ref)
    # outputs) rather than re-DMAing the weights inside this call.

    out = pl.pallas_call(
        split_similarity_kernel,
        out_shape=jax.ShapeDtypeStruct((Bp, OUT_LANES), jnp.float32),
        grid=grid,
        in_specs=in_specs,
        out_specs=out_spec,
        compiler_params=pltpu.CompilerParams(
            dimension_semantics=dim_sem,
            vmem_limit_bytes=vmem_limit),
        cost_estimate=cost,
    )(a, t, c, *weights)

    return out[:B, 0]


def _kaiming_normal(key, out_f, in_f, a=math.sqrt(5)):
    """torch.nn.init.kaiming_normal_(weight, a=sqrt(5)) on a [out, in] weight,
    returned pre-transposed as [in, out] for x @ W."""
    gain = math.sqrt(2.0 / (1.0 + a * a))
    std = gain / math.sqrt(in_f)          # fan_in mode (torch default)
    w = std * jax.random.normal(key, (out_f, in_f), dtype=jnp.float32)
    return jnp.transpose(w)               # [in, out]


def make_params(key, output_dim):
    """Mlp(size_list=[2D, 2D, D]) params for both embedders (num_layer=2).

    First-layer weights are split along the input axis (rows [:D] multiply the
    a/t half of the torch.cat input, rows [D:] multiply the c half).  The two
    c-halves are fused along the output axis into one [D, 4D] bf16 weight so
    the shared c @ W_c matmul is computed once per grid step.  Biases stay f32
    for the post-matmul epilogue."""
    D = output_dim
    H = 2 * D
    k1a, k2a, k1t, k2t = jax.random.split(key, 4)
    w1_ac = _kaiming_normal(k1a, H, H)     # [2D, 2D] (in, out)
    w2_ac = _kaiming_normal(k2a, D, H)     # [2D, D]
    w1_tc = _kaiming_normal(k1t, H, H)
    w2_tc = _kaiming_normal(k2t, D, H)
    bf = jnp.bfloat16
    return {
        "w1_ac_a": w1_ac[:D].astype(bf),
        "w1_tc_t": w1_tc[:D].astype(bf),
        "w1_c": jnp.concatenate([w1_ac[D:], w1_tc[D:]], axis=1).astype(bf),  # [D, 4D]
        "b1_ac": jnp.zeros((1, H), jnp.float32),
        "b1_tc": jnp.zeros((1, H), jnp.float32),
        "w2_ac": w2_ac.astype(bf), "b2_ac": jnp.zeros((1, D), jnp.float32),
        "w2_tc": w2_tc.astype(bf), "b2_tc": jnp.zeros((1, D), jnp.float32),
    }


def _reference_forward(pooled_a, pooled_t, pooled_c, params):
    """Plain-JAX reference mirroring the kernel's bf16-in / f32-accumulate
    numerics (the bf16 downcast of the hidden activation deviates ~1e-2-level
    from an fp32 torch module; acceptable for this similarity head)."""
    f32 = jnp.float32
    a = pooled_a.astype(f32)
    t = pooled_t.astype(f32)
    c = pooled_c.astype(f32)
    D = a.shape[-1]
    H = 2 * D
    w1_c = params["w1_c"].astype(f32)

    def mlp(x, wx, hc, b1, w2, b2):
        h = x @ wx.astype(f32) + hc + b1
        h = jnp.maximum(h, LEAKY_SLOPE * h)
        h = h.astype(jnp.bfloat16).astype(f32)   # kernel feeds bf16 h to the MXU
        return h @ w2.astype(f32) + b2

    ac = mlp(a, params["w1_ac_a"], c @ w1_c[:, :H], params["b1_ac"],
             params["w2_ac"], params["b2_ac"])
    tc = mlp(t, params["w1_tc_t"], c @ w1_c[:, H:], params["b1_tc"],
             params["w2_tc"], params["b2_tc"])
    num = jnp.sum(ac * tc, axis=-1)
    den = jnp.sqrt(jnp.maximum(jnp.sum(ac * ac, axis=-1) * jnp.sum(tc * tc, axis=-1),
                               COS_EPS * COS_EPS))
    return (num / den + 1.0) * 0.5


if __name__ == "__main__":
    # TODO(synk): the DeBERTa backbone / pooler / dropout of the original module
    # are an external pretrained transformer and are not reimplemented; pooled
    # embeddings are taken as kernel inputs.
    B = 8          # batch
    D = 32         # self.model.pooler.output_dim (small demo size)

    key = jax.random.PRNGKey(0)
    k_a, k_t, k_c, k_p = jax.random.split(key, 4)
    pooled_a = jax.random.normal(k_a, (B, D), dtype=jnp.float32).astype(jnp.bfloat16)
    pooled_t = jax.random.normal(k_t, (B, D), dtype=jnp.float32).astype(jnp.bfloat16)
    pooled_c = jax.random.normal(k_c, (B, D), dtype=jnp.float32).astype(jnp.bfloat16)
    params = make_params(k_p, D)

    logits = split_similarity_forward(pooled_a, pooled_t, pooled_c, params)
    logits = jax.block_until_ready(logits)

    ref = _reference_forward(pooled_a, pooled_t, pooled_c, params)
    assert logits.shape == (B,)
    assert jnp.allclose(logits, ref, atol=2e-3, rtol=2e-3), (logits, ref)

    print("KERNEL_OK")
</pallas_src>

<mosaic_0001>
module attributes {stable_mosaic.version = 11 : i64} {
  func.func @split_similarity_kernel(%arg0: i32, %arg1: memref<16x32xbf16, #tpu.memory_space<vmem>>, %arg2: memref<16x32xbf16, #tpu.memory_space<vmem>>, %arg3: memref<16x32xbf16, #tpu.memory_space<vmem>>, %arg4: memref<32x64xbf16, #tpu.memory_space<vmem>>, %arg5: memref<32x64xbf16, #tpu.memory_space<vmem>>, %arg6: memref<32x128xbf16, #tpu.memory_space<vmem>>, %arg7: memref<1x64xf32, #tpu.memory_space<vmem>>, %arg8: memref<1x64xf32, #tpu.memory_space<vmem>>, %arg9: memref<64x32xbf16, #tpu.memory_space<vmem>>, %arg10: memref<1x32xf32, #tpu.memory_space<vmem>>, %arg11: memref<64x32xbf16, #tpu.memory_space<vmem>>, %arg12: memref<1x32xf32, #tpu.memory_space<vmem>>, %arg13: memref<16x128xf32, #tpu.memory_space<vmem>>) attributes {dimension_semantics = [#tpu.dimension_semantics<arbitrary>], iteration_bounds = array<i64: 1>, scalar_prefetch = 0 : i64, scratch_operands = 0 : i64, tpu.core_type = #tpu.core_type<tc>, window_params = [{transform_indices = @transform_0, window_bounds = array<i64: 16, 32>}, {transform_indices = @transform_1, window_bounds = array<i64: 16, 32>}, {transform_indices = @transform_2, window_bounds = array<i64: 16, 32>}, {pipeline_mode = #tpu.pipeline_mode<synchronous>, transform_indices = @transform_3, window_bounds = array<i64: 32, 64>}, {pipeline_mode = #tpu.pipeline_mode<synchronous>, transform_indices = @transform_4, window_bounds = array<i64: 32, 64>}, {pipeline_mode = #tpu.pipeline_mode<synchronous>, transform_indices = @transform_5, window_bounds = array<i64: 32, 128>}, {pipeline_mode = #tpu.pipeline_mode<synchronous>, transform_indices = @transform_6, window_bounds = array<i64: 1, 64>}, {pipeline_mode = #tpu.pipeline_mode<synchronous>, transform_indices = @transform_7, window_bounds = array<i64: 1, 64>}, {pipeline_mode = #tpu.pipeline_mode<synchronous>, transform_indices = @transform_8, window_bounds = array<i64: 64, 32>}, {pipeline_mode = #tpu.pipeline_mode<synchronous>, transform_indices = @transform_9, window_bounds = array<i64: 1, 32>}, {pipeline_mode = #tpu.pipeline_mode<synchronous>, transform_indices = @transform_10, window_bounds = array<i64: 64, 32>}, {pipeline_mode = #tpu.pipeline_mode<synchronous>, transform_indices = @transform_11, window_bounds = array<i64: 1, 32>}, {transform_indices = @transform_12, window_bounds = array<i64: 16, 128>}]} {
    %c0 = arith.constant 0 : index
    %c0_0 = arith.constant 0 : index
    %0 = vector.load %arg1[%c0, %c0_0] : memref<16x32xbf16, #tpu.memory_space<vmem>>, vector<16x32xbf16>
    %c0_1 = arith.constant 0 : index
    %c0_2 = arith.constant 0 : index
    %1 = vector.load %arg2[%c0_1, %c0_2] : memref<16x32xbf16, #tpu.memory_space<vmem>>, vector<16x32xbf16>
    %c0_3 = arith.constant 0 : index
    %c0_4 = arith.constant 0 : index
    %2 = vector.load %arg3[%c0_3, %c0_4] : memref<16x32xbf16, #tpu.memory_space<vmem>>, vector<16x32xbf16>
    %c0_5 = arith.constant 0 : index
    %c0_6 = arith.constant 0 : index
    %3 = vector.load %arg6[%c0_5, %c0_6] : memref<32x128xbf16, #tpu.memory_space<vmem>>, vector<32x128xbf16>
    %cst = arith.constant dense<0.000000e+00> : vector<16x128xf32>
    %4 = tpu.matmul %2, %3, %cst {dimension_numbers = #tpu.dot_dimension_numbers<[1], [0], [0], [1], [0, 0, 1, 1], [], []>} : vector<16x32xbf16>, vector<32x128xbf16>, vector<16x128xf32> -> vector<16x128xf32>
    %c0_7 = arith.constant 0 : index
    %c0_8 = arith.constant 0 : index
    %5 = vector.load %arg4[%c0_7, %c0_8] : memref<32x64xbf16, #tpu.memory_space<vmem>>, vector<32x64xbf16>
    %cst_9 = arith.constant dense<0.000000e+00> : vector<16x64xf32>
    %6 = tpu.matmul %0, %5, %cst_9 {dimension_numbers = #tpu.dot_dimension_numbers<[1], [0], [0], [1], [0, 0, 1, 1], [], []>} : vector<16x32xbf16>, vector<32x64xbf16>, vector<16x64xf32> -> vector<16x64xf32>
    %7 = vector.extract_strided_slice %4 {offsets = [0, 0], sizes = [16, 64], strides = [1, 1]} : vector<16x128xf32> to vector<16x64xf32>
    %8 = arith.addf %6, %7 : vector<16x64xf32>
    %c0_10 = arith.constant 0 : index
    %c0_11 = arith.constant 0 : index
    %9 = vector.load %arg7[%c0_10, %c0_11] : memref<1x64xf32, #tpu.memory_space<vmem>>, vector<1x64xf32>
    %10 = vector.broadcast %9 : vector<1x64xf32> to vector<16x64xf32>
    %11 = arith.addf %8, %10 : vector<16x64xf32>
    %cst_12 = arith.constant 0.00999999977 : f32
    %12 = vector.broadcast %cst_12 : f32 to vector<16x64xf32>
    %13 = arith.mulf %12, %11 : vector<16x64xf32>
    %14 = arith.maximumf %11, %13 : vector<16x64xf32>
    %15 = arith.truncf %14 : vector<16x64xf32> to vector<16x64xbf16>
    %c0_13 = arith.constant 0 : index
    %c0_14 = arith.constant 0 : index
    %16 = vector.load %arg9[%c0_13, %c0_14] : memref<64x32xbf16, #tpu.memory_space<vmem>>, vector<64x32xbf16>
    %cst_15 = arith.constant dense<0.000000e+00> : vector<16x32xf32>
    %17 = tpu.matmul %15, %16, %cst_15 {dimension_numbers = #tpu.dot_dimension_numbers<[1], [0], [0], [1], [0, 0, 1, 1], [], []>} : vector<16x64xbf16>, vector<64x32xbf16>, vector<16x32xf32> -> vector<16x32xf32>
    %c0_16 = arith.constant 0 : index
    %c0_17 = arith.constant 0 : index
    %18 = vector.load %arg10[%c0_16, %c0_17] : memref<1x32xf32, #tpu.memory_space<vmem>>, vector<1x32xf32>
    %19 = vector.broadcast %18 : vector<1x32xf32> to vector<16x32xf32>
    %20 = arith.addf %17, %19 : vector<16x32xf32>
    %c0_18 = arith.constant 0 : index
    %c0_19 = arith.constant 0 : index
    %21 = vector.load %arg5[%c0_18, %c0_19] : memref<32x64xbf16, #tpu.memory_space<vmem>>, vector<32x64xbf16>
    %cst_20 = arith.constant dense<0.000000e+00> : vector<16x64xf32>
    %22 = tpu.matmul %1, %21, %cst_20 {dimension_numbers = #tpu.dot_dimension_numbers<[1], [0], [0], [1], [0, 0, 1, 1], [], []>} : vector<16x32xbf16>, vector<32x64xbf16>, vector<16x64xf32> -> vector<16x64xf32>
    %23 = vector.extract_strided_slice %4 {offsets = [0, 64], sizes = [16, 64], strides = [1, 1]} : vector<16x128xf32> to vector<16x64xf32>
    %24 = arith.addf %22, %23 : vector<16x64xf32>
    %c0_21 = arith.constant 0 : index
    %c0_22 = arith.constant 0 : index
    %25 = vector.load %arg8[%c0_21, %c0_22] : memref<1x64xf32, #tpu.memory_space<vmem>>, vector<1x64xf32>
    %26 = vector.broadcast %25 : vector<1x64xf32> to vector<16x64xf32>
    %27 = arith.addf %24, %26 : vector<16x64xf32>
    %cst_23 = arith.constant 0.00999999977 : f32
    %28 = vector.broadcast %cst_23 : f32 to vector<16x64xf32>
    %29 = arith.mulf %28, %27 : vector<16x64xf32>
    %30 = arith.maximumf %27, %29 : vector<16x64xf32>
    %31 = arith.truncf %30 : vector<16x64xf32> to vector<16x64xbf16>
    %c0_24 = arith.constant 0 : index
    %c0_25 = arith.constant 0 : index
    %32 = vector.load %arg11[%c0_24, %c0_25] : memref<64x32xbf16, #tpu.memory_space<vmem>>, vector<64x32xbf16>
    %cst_26 = arith.constant dense<0.000000e+00> : vector<16x32xf32>
    %33 = tpu.matmul %31, %32, %cst_26 {dimension_numbers = #tpu.dot_dimension_numbers<[1], [0], [0], [1], [0, 0, 1, 1], [], []>} : vector<16x64xbf16>, vector<64x32xbf16>, vector<16x32xf32> -> vector<16x32xf32>
    %c0_27 = arith.constant 0 : index
    %c0_28 = arith.constant 0 : index
    %34 = vector.load %arg12[%c0_27, %c0_28] : memref<1x32xf32, #tpu.memory_space<vmem>>, vector<1x32xf32>
    %35 = vector.broadcast %34 : vector<1x32xf32> to vector<16x32xf32>
    %36 = arith.addf %33, %35 : vector<16x32xf32>
    %37 = arith.mulf %20, %36 : vector<16x32xf32>
    %cst_29 = arith.constant dense<0.000000e+00> : vector<16xf32>
    %38 = vector.multi_reduction <add>, %37, %cst_29 [1] : vector<16x32xf32> to vector<16xf32>
    %39 = vector.shape_cast %38 : vector<16xf32> to vector<16x1xf32>
    %40 = arith.mulf %20, %20 : vector<16x32xf32>
    %cst_30 = arith.constant dense<0.000000e+00> : vector<16xf32>
    %41 = vector.multi_reduction <add>, %40, %cst_30 [1] : vector<16x32xf32> to vector<16xf32>
    %42 = vector.shape_cast %41 : vector<16xf32> to vector<16x1xf32>
    %43 = arith.mulf %36, %36 : vector<16x32xf32>
    %cst_31 = arith.constant dense<0.000000e+00> : vector<16xf32>
    %44 = vector.multi_reduction <add>, %43, %cst_31 [1] : vector<16x32xf32> to vector<16xf32>
    %45 = vector.shape_cast %44 : vector<16xf32> to vector<16x1xf32>
    %46 = arith.mulf %42, %45 : vector<16x1xf32>
    %cst_32 = arith.constant 1.000000e-16 : f32
    %47 = vector.broadcast %cst_32 : f32 to vector<16x1xf32>
    %48 = arith.maximumf %46, %47 : vector<16x1xf32>
    %49 = math.rsqrt %48 : vector<16x1xf32>
    %50 = arith.mulf %39, %49 : vector<16x1xf32>
    %cst_33 = arith.constant 1.000000e+00 : f32
    %51 = vector.broadcast %cst_33 : f32 to vector<16x1xf32>
    %52 = arith.addf %50, %51 : vector<16x1xf32>
    %cst_34 = arith.constant 5.000000e-01 : f32
    %53 = vector.broadcast %cst_34 : f32 to vector<16x1xf32>
    %54 = arith.mulf %52, %53 : vector<16x1xf32>
    %55 = vector.shape_cast %54 : vector<16x1xf32> to vector<16x1xf32>
    %56 = vector.broadcast %55 : vector<16x1xf32> to vector<16x128xf32>
    %c0_35 = arith.constant 0 : index
    %c0_36 = arith.constant 0 : index
    %57 = vector.load %arg13[%c0_35, %c0_36] : memref<16x128xf32, #tpu.memory_space<vmem>>, vector<16x128xf32>
    tpu.vector_store %arg13[%c0_35, %c0_36], %56 {strides = array<i32>} : memref<16x128xf32, #tpu.memory_space<vmem>>, vector<16x128xf32>,
    return
  }
  func.func @transform_0(%arg0: i32) -> (i32, i32) {
    %c0_i32 = arith.constant 0 : i32
    %c0_i32_0 = arith.constant 0 : i32
    return %arg0, %c0_i32 : i32, i32
  }
  func.func @transform_1(%arg0: i32) -> (i32, i32) {
    %c0_i32 = arith.constant 0 : i32
    %c0_i32_0 = arith.constant 0 : i32
    return %arg0, %c0_i32 : i32, i32
  }
  func.func @transform_2(%arg0: i32) -> (i32, i32) {
    %c0_i32 = arith.constant 0 : i32
    %c0_i32_0 = arith.constant 0 : i32
    return %arg0, %c0_i32 : i32, i32
  }
  func.func @transform_3(%arg0: i32) -> (i32, i32) {
    %c0_i32 = arith.constant 0 : i32
    %c0_i32_0 = arith.constant 0 : i32
    %c0_i32_1 = arith.constant 0 : i32
    return %c0_i32, %c0_i32_0 : i32, i32
  }
  func.func @transform_4(%arg0: i32) -> (i32, i32) {
    %c0_i32 = arith.constant 0 : i32
    %c0_i32_0 = arith.constant 0 : i32
    %c0_i32_1 = arith.constant 0 : i32
    return %c0_i32, %c0_i32_0 : i32, i32
  }
  func.func @transform_5(%arg0: i32) -> (i32, i32) {
    %c0_i32 = arith.constant 0 : i32
    %c0_i32_0 = arith.constant 0 : i32
    %c0_i32_1 = arith.constant 0 : i32
    return %c0_i32, %c0_i32_0 : i32, i32
  }
  func.func @transform_6(%arg0: i32) -> (i32, i32) {
    %c0_i32 = arith.constant 0 : i32
    %c0_i32_0 = arith.constant 0 : i32
    %c0_i32_1 = arith.constant 0 : i32
    return %c0_i32, %c0_i32_0 : i32, i32
  }
  func.func @transform_7(%arg0: i32) -> (i32, i32) {
    %c0_i32 = arith.constant 0 : i32
    %c0_i32_0 = arith.constant 0 : i32
    %c0_i32_1 = arith.constant 0 : i32
    return %c0_i32, %c0_i32_0 : i32, i32
  }
  func.func @transform_8(%arg0: i32) -> (i32, i32) {
    %c0_i32 = arith.constant 0 : i32
    %c0_i32_0 = arith.constant 0 : i32
    %c0_i32_1 = arith.constant 0 : i32
    return %c0_i32, %c0_i32_0 : i32, i32
  }
  func.func @transform_9(%arg0: i32) -> (i32, i32) {
    %c0_i32 = arith.constant 0 : i32
    %c0_i32_0 = arith.constant 0 : i32
    %c0_i32_1 = arith.constant 0 : i32
    return %c0_i32, %c0_i32_0 : i32, i32
  }
  func.func @transform_10(%arg0: i32) -> (i32, i32) {
    %c0_i32 = arith.constant 0 : i32
    %c0_i32_0 = arith.constant 0 : i32
    %c0_i32_1 = arith.constant 0 : i32
    return %c0_i32, %c0_i32_0 : i32, i32
  }
  func.func @transform_11(%arg0: i32) -> (i32, i32) {
    %c0_i32 = arith.constant 0 : i32
    %c0_i32_0 = arith.constant 0 : i32
    %c0_i32_1 = arith.constant 0 : i32
    return %c0_i32, %c0_i32_0 : i32, i32
  }
  func.func @transform_12(%arg0: i32) -> (i32, i32) {
    %c0_i32 = arith.constant 0 : i32
    %c0_i32_0 = arith.constant 0 : i32
    return %arg0, %c0_i32 : i32, i32
  }
}

</mosaic_0001>

<llo_original>
// kernel: tpu_custom_call.1
$region0: #{tpu_custom_call.1}
  #allocation0 [shape = 'u32[]', space=smem, size = 0x4, offset = 0x4, fixed_abs, tag = 'smem constant byte address 0x4 - core index']
  #allocation1 [shape = 'u32[144,128]{1,0:T(1,128)}', space=vmem, size = 0x12000, scoped, tag = 'internal scratch']
  %s0 = inlined_call_operand.vmem [shape: bf16[16,32], index: 0, kind: input, shape index: {}]
  %s1 = inlined_call_operand.vmem [shape: bf16[16,32], index: 1, kind: input, shape index: {}]
  %s2 = inlined_call_operand.vmem [shape: bf16[16,32], index: 2, kind: input, shape index: {}]
  %s3 = inlined_call_operand.vmem [shape: bf16[32,64], index: 3, kind: input, shape index: {}]
  %s4 = inlined_call_operand.vmem [shape: bf16[32,64], index: 4, kind: input, shape index: {}]
  %s5 = inlined_call_operand.vmem [shape: bf16[32,128], index: 5, kind: input, shape index: {}]
  %s6 = inlined_call_operand.vmem [shape: f32[1,64], index: 6, kind: input, shape index: {}]
  %s7 = inlined_call_operand.vmem [shape: f32[1,64], index: 7, kind: input, shape index: {}]
  %s8 = inlined_call_operand.vmem [shape: bf16[64,32], index: 8, kind: input, shape index: {}]
  %s9 = inlined_call_operand.vmem [shape: f32[1,32], index: 9, kind: input, shape index: {}]
  %s10 = inlined_call_operand.vmem [shape: bf16[64,32], index: 10, kind: input, shape index: {}]
  %s11 = inlined_call_operand.vmem [shape: f32[1,32], index: 11, kind: input, shape index: {}]
  %s12 = inlined_call_operand.hbm [shape: f32[16,128], index: 12, kind: output, shape index: {}]
  %s13 = sld [smem:[#allocation0]]
  $region58: #{tpu_custom_call.1} parent=0
    _
  %s15 = ssub.s32 1, %s13
  %s16 = scalar_select 0, %s15, %s13
  $region1: #{tpu_custom_call.1} parent=0
    #allocation2 [shape = 'u8[8192]{0}', space=vmem, size = 0x2000, scoped, tag = 'output window, operand 0, single buffered']
    #allocation3 [shape = 's32[1]{0}', space=sflag, size = 0x4, scoped, tag = 'scoped memory for tpu_custom_call.1']
    %17 = vsyncpa [#allocation3], 0
    // Predicated region
    $region2: #{tpu_custom_call.1} parent=1 // pred_check
      _
    $region3: #{tpu_custom_call.1} parent=1 // pred_check_branch
      %19 = sbr.rel (0) target = $region5
    $region4: #{tpu_custom_call.1} parent=1 // pred_region
      _
    $region5: #{tpu_custom_call.1} parent=1 // pred_fallthru
      _
    // Predicated region
    $region6: #{tpu_custom_call.1} parent=1 // pred_check
      _
    $region7: #{tpu_custom_call.1} parent=1 // pred_check_branch
      %21 = sbr.rel (0) target = $region9
    $region8: #{tpu_custom_call.1} parent=1 // pred_region
      _
    $region9: #{tpu_custom_call.1} parent=1 // pred_fallthru
      _
    // Predicated region
    $region10: #{tpu_custom_call.1} parent=1 // pred_check
      _
    $region11: #{tpu_custom_call.1} parent=1 // pred_check_branch
      %23 = sbr.rel (0) target = $region13
    $region12: #{tpu_custom_call.1} parent=1 // pred_region
      _
    $region13: #{tpu_custom_call.1} parent=1 // pred_fallthru
      _
    // Predicated region
    $region14: #{tpu_custom_call.1} parent=1 // pred_check
      _
    $region15: #{tpu_custom_call.1} parent=1 // pred_check_branch
      %25 = sbr.rel (0) target = $region17
    $region16: #{tpu_custom_call.1} parent=1 // pred_region
      _
    $region17: #{tpu_custom_call.1} parent=1 // pred_fallthru
      _
    // Predicated region
    $region18: #{tpu_custom_call.1} parent=1 // pred_check
      _
    $region19: #{tpu_custom_call.1} parent=1 // pred_check_branch
      %27 = sbr.rel (0) target = $region21
    $region20: #{tpu_custom_call.1} parent=1 // pred_region
      _
    $region21: #{tpu_custom_call.1} parent=1 // pred_fallthru
      _
    // Predicated region
    $region22: #{tpu_custom_call.1} parent=1 // pred_check
      _
    $region23: #{tpu_custom_call.1} parent=1 // pred_check_branch
      %29 = sbr.rel (0) target = $region25
    $region24: #{tpu_custom_call.1} parent=1 // pred_region
      _
    $region25: #{tpu_custom_call.1} parent=1 // pred_fallthru
      _
    // Predicated region
    $region26: #{tpu_custom_call.1} parent=1 // pred_check
      _
    $region27: #{tpu_custom_call.1} parent=1 // pred_check_branch
      %31 = sbr.rel (0) target = $region29
    $region28: #{tpu_custom_call.1} parent=1 // pred_region
      _
    $region29: #{tpu_custom_call.1} parent=1 // pred_fallthru
      _
    // Predicated region
    $region30: #{tpu_custom_call.1} parent=1 // pred_check
      _
    $region31: #{tpu_custom_call.1} parent=1 // pred_check_branch
      %33 = sbr.rel (0) target = $region33
    $region32: #{tpu_custom_call.1} parent=1 // pred_region
      _
    $region33: #{tpu_custom_call.1} parent=1 // pred_fallthru
      _
    // Predicated region
    $region34: #{tpu_custom_call.1} parent=1 // pred_check
      _
    $region35: #{tpu_custom_call.1} parent=1 // pred_check_branch
      %35 = sbr.rel (0) target = $region37
    $region36: #{tpu_custom_call.1} parent=1 // pred_region
      _
    $region37: #{tpu_custom_call.1} parent=1 // pred_fallthru
      _
    // Predicated region
    $region38: #{tpu_custom_call.1} parent=1 // pred_check
      _
    $region39: #{tpu_custom_call.1} parent=1 // pred_check_branch
      %37 = sbr.rel (0) target = $region41
    $region40: #{tpu_custom_call.1} parent=1 // pred_region
      _
    $region41: #{tpu_custom_call.1} parent=1 // pred_fallthru
      _
    // Predicated region
    $region42: #{tpu_custom_call.1} parent=1 // pred_check
      _
    $region43: #{tpu_custom_call.1} parent=1 // pred_check_branch
      %39 = sbr.rel (0) target = $region45
    $region44: #{tpu_custom_call.1} parent=1 // pred_region
      _
    $region45: #{tpu_custom_call.1} parent=1 // pred_fallthru
      _
    // Predicated region
    $region46: #{tpu_custom_call.1} parent=1 // pred_check
      _
    $region47: #{tpu_custom_call.1} parent=1 // pred_check_branch
      %41 = sbr.rel (0) target = $region49
    $region48: #{tpu_custom_call.1} parent=1 // pred_region
      _
    $region49: #{tpu_custom_call.1} parent=1 // pred_fallthru
      _
    %v43 = vld [vmem:[%s0] sm:$0xf]
    %v44 = vld [vmem:[%s0 + $0x4] sm:$0xf]
    %v45 = vld [vmem:[%s1] sm:$0xf]
    %v46 = vld [vmem:[%s1 + $0x4] sm:$0xf]
    %v47 = vld [vmem:[%s2] sm:$0xf]
    %v48 = vld [vmem:[%s2 + $0x4] sm:$0xf]
    %v49 = vld [vmem:[%s5] sm:$0xf]
    %v50 = vld [vmem:[%s5 + $0x4] sm:$0xf]
    %v51 = vld [vmem:[%s5 + $0x8] sm:$0xf]
    %v52 = vld [vmem:[%s5 + $0xc] sm:$0xf]
    %v55 = vunpack.c.l.b16 %v47
    %v56 = vunpack.c.l.b16 %v48
    %v57 = vpack.c.b16 %v56, %v55
    %v62 = vunpack.c.l.b16 %v49
    %v63 = vunpack.c.l.b16 %v50
    %v64 = vunpack.c.l.b16 %v51
    %v65 = vunpack.c.l.b16 %v52
    %v66 = vpack.c.b16 %v63, %v62
    %v67 = vpack.c.b16 %v65, %v64
    %vm70 = vcmask 261120
    %v72 = vsel %vm70, %v57, 0
    %74 = vmatprep.subr.bf16.mxu0 0
    %75 = vmatpush1.bf16.msra.mxu0 0
    %76 = vmatprep.subr.bf16.mxu0 0
    %77 = vmatpush1.bf16.msra.mxu0 0
    %78 = vmatprep.subr.bf16.mxu0 0
    %79 = vmatpush1.bf16.msra.mxu0 0
    %80 = vmatprep.subr.bf16.mxu0 0
    %81 = vmatpush1.bf16.msra.mxu0 0
    %82 = vmatprep.subr.bf16.mxu0 0
    %83 = vmatpush1.bf16.msra.mxu0 0
    %84 = vmatprep.subr.bf16.mxu0 0
    %85 = vmatpush1.bf16.msra.mxu0 0
    %86 = vmatprep.subr.bf16.mxu0 0
    %87 = vmatpush1.bf16.msra.mxu0 %v67
    %88 = vmatprep.subr.bf16.mxu0 0
    %89 = vmatpush1.bf16.msra.mxu0 %v66
    %90 = vmatprep.subr.bf16.mxu0 0
    %91 = vmatpush2.bf16.msra.mxu0 0
    %92 = vmatprep.subr.bf16.mxu0 0
    %93 = vmatpush2.bf16.msra.mxu0 0
    %94 = vmatprep.subr.bf16.mxu0 0
    %95 = vmatpush2.bf16.msra.mxu0 0
    %96 = vmatprep.subr.bf16.mxu0 0
    %97 = vmatpush2.bf16.msra.mxu0 0
    %98 = vmatprep.subr.bf16.mxu0 0
    %99 = vmatpush2.bf16.msra.mxu0 0
    %100 = vmatprep.subr.bf16.mxu0 0
    %101 = vmatpush2.bf16.msra.mxu0 0
    %102 = vmatprep.subr.bf16.mxu0 0
    %103 = vmatpush2.bf16.msra.mxu0 0
    %104 = vmatprep.subr.bf16.mxu0 0
    %105 = vmatpush2.bf16.msra.mxu0 0
    %106 = vmatprep.mubr.bf16.mxu0 0
    %107 = vmatmul.mubr.bf16.gmra.mxu0 %v72
    %v108 = vpop.f32.mrf.mxu0
    %v109 = vadd.f32 0.0, %v108
    %v110 = vpop.f32.mrf.mxu0
    %v111 = vpop.f32.mrf.mxu0
    %v112 = vadd.f32 0.0, %v111
    %v113 = vpop.f32.mrf.mxu0
    %114 = vdwg.mxu0
    %v115 = vld [vmem:[%s3] sm:$0xf]
    %v116 = vld [vmem:[%s3 + $0x4] sm:$0xf]
    %v117 = vld [vmem:[%s3 + $0x8] sm:$0xf]
    %v118 = vld [vmem:[%s3 + $0xc] sm:$0xf]
    %v121 = vunpack.c.l.b16 %v43
    %v122 = vunpack.c.l.b16 %v44
    %v123 = vpack.c.b16 %v122, %v121
    %v128 = vunpack.c.l.b16 %v115
    %v129 = vunpack.c.l.b16 %v116
    %v130 = vunpack.c.l.b16 %v117
    %v131 = vunpack.c.l.b16 %v118
    %v132 = vpack.c.b16 %v129, %v128
    %v133 = vpack.c.b16 %v131, %v130
    %v137 = vsel %vm70, %v123, 0
    %139 = vmatprep.subr.bf16.mxu0 0
    %140 = vmatpush1.bf16.msra.mxu0 0
    %141 = vmatprep.subr.bf16.mxu0 0
    %142 = vmatpush1.bf16.msra.mxu0 0
    %143 = vmatprep.subr.bf16.mxu0 0
    %144 = vmatpush1.bf16.msra.mxu0 0
    %145 = vmatprep.subr.bf16.mxu0 0
    %146 = vmatpush1.bf16.msra.mxu0 0
    %147 = vmatprep.subr.bf16.mxu0 0
    %148 = vmatpush1.bf16.msra.mxu0 0
    %149 = vmatprep.subr.bf16.mxu0 0
    %150 = vmatpush1.bf16.msra.mxu0 0
    %151 = vmatprep.subr.bf16.mxu0 0
    %152 = vmatpush1.bf16.msra.mxu0 %v133
    %153 = vmatprep.subr.bf16.mxu0 0
    %154 = vmatpush1.bf16.msra.mxu0 %v132
    %155 = vmatprep.subr.bf16.mxu0 0
    %156 = vmatpush2.bf16.msra.mxu0 0
    %157 = vmatprep.subr.bf16.mxu0 0
    %158 = vmatpush2.bf16.msra.mxu0 0
    %159 = vmatprep.subr.bf16.mxu0 0
    %160 = vmatpush2.bf16.msra.mxu0 0
    %161 = vmatprep.subr.bf16.mxu0 0
    %162 = vmatpush2.bf16.msra.mxu0 0
    %163 = vmatprep.subr.bf16.mxu0 0
    %164 = vmatpush2.bf16.msra.mxu0 0
    %165 = vmatprep.subr.bf16.mxu0 0
    %166 = vmatpush2.bf16.msra.mxu0 0
    %167 = vmatprep.subr.bf16.mxu0 0
    %168 = vmatpush2.bf16.msra.mxu0 0
    %169 = vmatprep.subr.bf16.mxu0 0
    %170 = vmatpush2.bf16.msra.mxu0 0
    %171 = vmatprep.mubr.bf16.mxu0 0
    %172 = vmatmul.mubr.bf16.gmra.mxu0 %v137
    %v173 = vpop.f32.mrf.mxu0
    %v174 = vadd.f32 %v109, %v173
    %v175 = vpop.f32.mrf.mxu0
    %v176 = vpop.f32.mrf.mxu0
    %v177 = vadd.f32 %v112, %v176
    %v178 = vpop.f32.mrf.mxu0
    %179 = vdwg.mxu0
    %v180 = vld [vmem:[%s6] sm:$0x1]
    %v182 = vlaneseq
    %v183 = vshrl.u32 %v182, 7
    %v184 = vsub.s32 0, %v183
    %v185 = vrot.slane %v180, %v184
    %v187 = vadd.f32 %v174, %v185
    %v188 = vadd.f32 %v177, %v185
    %v189 = vmul.f32 %v187, 0.01
    %v190 = vmul.f32 %v188, 0.01
    %v191 = vmax.f32 %v187, %v189
    %v192 = vmax.f32 %v188, %v190
    %v193 = vpack.c.bf16 %v192, %v191
    %v194 = vld [vmem:[%s8] sm:$0xf]
    %v195 = vld [vmem:[%s8 + $0x4] sm:$0xf]
    %v196 = vld [vmem:[%s8 + $0x8] sm:$0xf]
    %v197 = vld [vmem:[%s8 + $0xc] sm:$0xf]
    %v198 = vld [vmem:[%s8 + $0x10] sm:$0xf]
    %v199 = vld [vmem:[%s8 + $0x14] sm:$0xf]
    %v200 = vld [vmem:[%s8 + $0x18] sm:$0xf]
    %v201 = vld [vmem:[%s8 + $0x1c] sm:$0xf]
    %v202 = vld [vmem:[%s9] sm:$0x1]
    %v204 = vlaneseq
    %v205 = vshrl.u32 %v204, 7
    %v206 = vsub.s32 0, %v205
    %v207 = vrot.slane %v202, %v206
    %v217 = vunpack.c.l.b16 %v194
    %v218 = vunpack.c.l.b16 %v195
    %v219 = vunpack.c.l.b16 %v196
    %v220 = vunpack.c.l.b16 %v197
    %v221 = vunpack.c.l.b16 %v198
    %v222 = vunpack.c.l.b16 %v199
    %v223 = vunpack.c.l.b16 %v200
    %v224 = vunpack.c.l.b16 %v201
    %v225 = vpack.c.b16 %v218, %v217
    %v226 = vpack.c.b16 %v220, %v219
    %v227 = vpack.c.b16 %v222, %v221
    %v228 = vpack.c.b16 %v224, %v223
    %vm233 = vcmask 523264
    %v235 = vsel %vm233, %v193, 0
    %237 = vmatprep.subr.bf16.mxu0 0
    %238 = vmatpush1.bf16.msra.mxu0 0
    %239 = vmatprep.subr.bf16.mxu0 0
    %240 = vmatpush1.bf16.msra.mxu0 0
    %241 = vmatprep.subr.bf16.mxu0 0
    %242 = vmatpush1.bf16.msra.mxu0 0
    %243 = vmatprep.subr.bf16.mxu0 0
    %244 = vmatpush1.bf16.msra.mxu0 0
    %245 = vmatprep.subr.bf16.mxu0 0
    %246 = vmatpush1.bf16.msra.mxu0 %v228
    %247 = vmatprep.subr.bf16.mxu0 0
    %248 = vmatpush1.bf16.msra.mxu0 %v227
    %249 = vmatprep.subr.bf16.mxu0 0
    %250 = vmatpush1.bf16.msra.mxu0 %v226
    %251 = vmatprep.subr.bf16.mxu0 0
    %252 = vmatpush1.bf16.msra.mxu0 %v225
    %253 = vmatprep.subr.bf16.mxu0 0
    %254 = vmatpush2.bf16.msra.mxu0 0
    %255 = vmatprep.subr.bf16.mxu0 0
    %256 = vmatpush2.bf16.msra.mxu0 0
    %257 = vmatprep.subr.bf16.mxu0 0
    %258 = vmatpush2.bf16.msra.mxu0 0
    %259 = vmatprep.subr.bf16.mxu0 0
    %260 = vmatpush2.bf16.msra.mxu0 0
    %261 = vmatprep.subr.bf16.mxu0 0
    %262 = vmatpush2.bf16.msra.mxu0 0
    %263 = vmatprep.subr.bf16.mxu0 0
    %264 = vmatpush2.bf16.msra.mxu0 0
    %265 = vmatprep.subr.bf16.mxu0 0
    %266 = vmatpush2.bf16.msra.mxu0 0
    %267 = vmatprep.subr.bf16.mxu0 0
    %268 = vmatpush2.bf16.msra.mxu0 0
    %269 = vmatprep.mubr.bf16.mxu0 0
    %270 = vmatmul.mubr.bf16.gmra.mxu0 %v235
    %v271 = vpop.f32.mrf.mxu0
    %v272 = vadd.f32 %v207, %v271
    %v273 = vpop.f32.mrf.mxu0
    %v274 = vpop.f32.mrf.mxu0
    %v275 = vadd.f32 %v207, %v274
    %v276 = vpop.f32.mrf.mxu0
    %277 = vdwg.mxu0
    %v278 = vld [vmem:[%s4] sm:$0xf]
    %v279 = vld [vmem:[%s4 + $0x4] sm:$0xf]
    %v280 = vld [vmem:[%s4 + $0x8] sm:$0xf]
    %v281 = vld [vmem:[%s4 + $0xc] sm:$0xf]
    %v284 = vunpack.c.l.b16 %v45
    %v285 = vunpack.c.l.b16 %v46
    %v286 = vpack.c.b16 %v285, %v284
    %v291 = vunpack.c.l.b16 %v278
    %v292 = vunpack.c.l.b16 %v279
    %v293 = vunpack.c.l.b16 %v280
    %v294 = vunpack.c.l.b16 %v281
    %v295 = vpack.c.b16 %v292, %v291
    %v296 = vpack.c.b16 %v294, %v293
    %301 = vrot.lane.b32.xlu0 %v109, 64
    %v302 = vpop.permute.xlu0 %301
    %303 = vrot.lane.b32.xlu0 %v112, 64
    %v304 = vpop.permute.xlu0 %303
    %v308 = vsel %vm70, %v286, 0
    %310 = vmatprep.subr.bf16.mxu0 0
    %311 = vmatpush1.bf16.msra.mxu0 0
    %312 = vmatprep.subr.bf16.mxu0 0
    %313 = vmatpush1.bf16.msra.mxu0 0
    %314 = vmatprep.subr.bf16.mxu0 0
    %315 = vmatpush1.bf16.msra.mxu0 0
    %316 = vmatprep.subr.bf16.mxu0 0
    %317 = vmatpush1.bf16.msra.mxu0 0
    %318 = vmatprep.subr.bf16.mxu0 0
    %319 = vmatpush1.bf16.msra.mxu0 0
    %320 = vmatprep.subr.bf16.mxu0 0
    %321 = vmatpush1.bf16.msra.mxu0 0
    %322 = vmatprep.subr.bf16.mxu0 0
    %323 = vmatpush1.bf16.msra.mxu0 %v296
    %324 = vmatprep.subr.bf16.mxu0 0
    %325 = vmatpush1.bf16.msra.mxu0 %v295
    %326 = vmatprep.subr.bf16.mxu0 0
    %327 = vmatpush2.bf16.msra.mxu0 0
    %328 = vmatprep.subr.bf16.mxu0 0
    %329 = vmatpush2.bf16.msra.mxu0 0
    %330 = vmatprep.subr.bf16.mxu0 0
    %331 = vmatpush2.bf16.msra.mxu0 0
    %332 = vmatprep.subr.bf16.mxu0 0
    %333 = vmatpush2.bf16.msra.mxu0 0
    %334 = vmatprep.subr.bf16.mxu0 0
    %335 = vmatpush2.bf16.msra.mxu0 0
    %336 = vmatprep.subr.bf16.mxu0 0
    %337 = vmatpush2.bf16.msra.mxu0 0
    %338 = vmatprep.subr.bf16.mxu0 0
    %339 = vmatpush2.bf16.msra.mxu0 0
    %340 = vmatprep.subr.bf16.mxu0 0
    %341 = vmatpush2.bf16.msra.mxu0 0
    %342 = vmatprep.mubr.bf16.mxu0 0
    %343 = vmatmul.mubr.bf16.gmra.mxu0 %v308
    %v344 = vpop.f32.mrf.mxu0
    %v345 = vadd.f32 %v302, %v344
    %v346 = vpop.f32.mrf.mxu0
    %v347 = vpop.f32.mrf.mxu0
    %v348 = vadd.f32 %v304, %v347
    %v349 = vpop.f32.mrf.mxu0
    %350 = vdwg.mxu0
    %v351 = vld [vmem:[%s7] sm:$0x1]
    %v353 = vlaneseq
    %v354 = vshrl.u32 %v353, 7
    %v355 = vsub.s32 0, %v354
    %v356 = vrot.slane %v351, %v355
    %v358 = vadd.f32 %v345, %v356
    %v359 = vadd.f32 %v348, %v356
    %v360 = vmul.f32 %v358, 0.01
    %v361 = vmul.f32 %v359, 0.01
    %v362 = vmax.f32 %v358, %v360
    %v363 = vmax.f32 %v359, %v361
    %v364 = vpack.c.bf16 %v363, %v362
    %v365 = vld [vmem:[%s10] sm:$0xf]
    %v366 = vld [vmem:[%s10 + $0x4] sm:$0xf]
    %v367 = vld [vmem:[%s10 + $0x8] sm:$0xf]
    %v368 = vld [vmem:[%s10 + $0xc] sm:$0xf]
    %v369 = vld [vmem:[%s10 + $0x10] sm:$0xf]
    %v370 = vld [vmem:[%s10 + $0x14] sm:$0xf]
    %v371 = vld [vmem:[%s10 + $0x18] sm:$0xf]
    %v372 = vld [vmem:[%s10 + $0x1c] sm:$0xf]
    %v373 = vld [vmem:[%s11] sm:$0x1]
    %v375 = vlaneseq
    %v376 = vshrl.u32 %v375, 7
    %v377 = vsub.s32 0, %v376
    %v378 = vrot.slane %v373, %v377
    %v388 = vunpack.c.l.b16 %v365
    %v389 = vunpack.c.l.b16 %v366
    %v390 = vunpack.c.l.b16 %v367
    %v391 = vunpack.c.l.b16 %v368
    %v392 = vunpack.c.l.b16 %v369
    %v393 = vunpack.c.l.b16 %v370
    %v394 = vunpack.c.l.b16 %v371
    %v395 = vunpack.c.l.b16 %v372
    %v396 = vpack.c.b16 %v389, %v388
    %v397 = vpack.c.b16 %v391, %v390
    %v398 = vpack.c.b16 %v393, %v392
    %v399 = vpack.c.b16 %v395, %v394
    %v405 = vsel %vm233, %v364, 0
    %407 = vmatprep.subr.bf16.mxu0 0
    %408 = vmatpush1.bf16.msra.mxu0 0
    %409 = vmatprep.subr.bf16.mxu0 0
    %410 = vmatpush1.bf16.msra.mxu0 0
    %411 = vmatprep.subr.bf16.mxu0 0
    %412 = vmatpush1.bf16.msra.mxu0 0
    %413 = vmatprep.subr.bf16.mxu0 0
    %414 = vmatpush1.bf16.msra.mxu0 0
    %415 = vmatprep.subr.bf16.mxu0 0
    %416 = vmatpush1.bf16.msra.mxu0 %v399
    %417 = vmatprep.subr.bf16.mxu0 0
    %418 = vmatpush1.bf16.msra.mxu0 %v398
    %419 = vmatprep.subr.bf16.mxu0 0
    %420 = vmatpush1.bf16.msra.mxu0 %v397
    %421 = vmatprep.subr.bf16.mxu0 0
    %422 = vmatpush1.bf16.msra.mxu0 %v396
    %423 = vmatprep.subr.bf16.mxu0 0
    %424 = vmatpush2.bf16.msra.mxu0 0
    %425 = vmatprep.subr.bf16.mxu0 0
    %426 = vmatpush2.bf16.msra.mxu0 0
    %427 = vmatprep.subr.bf16.mxu0 0
    %428 = vmatpush2.bf16.msra.mxu0 0
    %429 = vmatprep.subr.bf16.mxu0 0
    %430 = vmatpush2.bf16.msra.mxu0 0
    %431 = vmatprep.subr.bf16.mxu0 0
    %432 = vmatpush2.bf16.msra.mxu0 0
    %433 = vmatprep.subr.bf16.mxu0 0
    %434 = vmatpush2.bf16.msra.mxu0 0
    %435 = vmatprep.subr.bf16.mxu0 0
    %436 = vmatpush2.bf16.msra.mxu0 0
    %437 = vmatprep.subr.bf16.mxu0 0
    %438 = vmatpush2.bf16.msra.mxu0 0
    %439 = vmatprep.mubr.bf16.mxu0 0
    %440 = vmatmul.mubr.bf16.gmra.mxu0 %v405
    %v441 = vpop.f32.mrf.mxu0
    %v442 = vadd.f32 %v378, %v441
    %v443 = vpop.f32.mrf.mxu0
    %v444 = vpop.f32.mrf.mxu0
    %v445 = vadd.f32 %v378, %v444
    %v446 = vpop.f32.mrf.mxu0
    %447 = vdwg.mxu0
    %v448 = vmul.f32 %v272, %v442
    %v449 = vmul.f32 %v275, %v445
    %v450 = vsel %vm70, %v448, 0.0
    %451 = vadd.xlane.f32.xlu0 %v450
    %v452 = vpop.xlane.xlu0 %451
    %v453 = vsel %vm70, %v449, 0.0
    %454 = vadd.xlane.f32.xlu0 %v453
    %v455 = vpop.xlane.xlu0 %454
    %v456 = vmul.f32 %v272, %v272
    %v457 = vmul.f32 %v275, %v275
    %v458 = vsel %vm70, %v456, 0.0
    %459 = vadd.xlane.f32.xlu0 %v458
    %v460 = vpop.xlane.xlu0 %459
    %v461 = vsel %vm70, %v457, 0.0
    %462 = vadd.xlane.f32.xlu0 %v461
    %v463 = vpop.xlane.xlu0 %462
    %v464 = vmul.f32 %v442, %v442
    %v465 = vmul.f32 %v445, %v445
    %v466 = vsel %vm70, %v464, 0.0
    %467 = vadd.xlane.f32.xlu0 %v466
    %v468 = vpop.xlane.xlu0 %467
    %v469 = vsel %vm70, %v465, 0.0
    %470 = vadd.xlane.f32.xlu0 %v469
    %v471 = vpop.xlane.xlu0 %470
    %v472 = vmul.f32 %v460, %v468
    %v473 = vmul.f32 %v463, %v471
    %v474 = vmax.f32 %v472, 1e-16
    %v475 = vmax.f32 %v473, 1e-16
    %v476 = vrsqrt.pop %v474
    %v477 = vrsqrt.pop %v475
    %v478 = vmul.f32 %v452, %v476
    %v479 = vmul.f32 %v455, %v477
    %v480 = vadd.f32 %v478, 1.0
    %v481 = vadd.f32 %v479, 1.0
    %v482 = vmul.f32 %v480, 0.5
    %v483 = vmul.f32 %v481, 0.5
    %484 = vst [vmem:[#allocation2] sm:$0xff] %v482
    %485 = vst [vmem:[#allocation2 + $0x8] sm:$0xff] %v483
    // Predicated region
    $region50: #{tpu_custom_call.1} parent=1 // pred_check
      _
    $region51: #{tpu_custom_call.1} parent=1 // pred_check_branch
      %487 = sbr.rel (0) target = $region53
    $region52: #{tpu_custom_call.1} parent=1 // pred_region
      %s489 = ssub.s32 256, 256
      %490 = vsyncadd [#allocation3], %s489
      %s491 = sshll.u32 [#allocation2], 4
      %s492 = int_to_ptr.vmem [resolvable:$true] %s491
      %497 = dma.vmem_to_hbm [thread:$0]  %s492, 256, %s12, [#allocation3], 128, 128, 8
    $region53: #{tpu_custom_call.1} parent=1 // pred_fallthru
      _
    // Predicated region
    $region54: #{tpu_custom_call.1} parent=1 // pred_check
      _
    $region55: #{tpu_custom_call.1} parent=1 // pred_check_branch
      %499 = sbr.rel (0) target = $region57
    $region56: #{tpu_custom_call.1} parent=1 // pred_region
      %500 = dma.done [#allocation3], 256
    $region57: #{tpu_custom_call.1} parent=1 // pred_fallthru
      _
    %501 = vsyncpa [#allocation3], 1

</llo_original>
